<compile_context>
chip_gen: v7x
topology: tpu7x:2x2x1
jax: 0.10.0
libtpu: 0.0.40
codegen_flags: <defaults>
</compile_context>

<pallas_src>
import functools

import jax
import jax.numpy as jnp
from jax.experimental import pallas as pl
from jax.experimental.pallas import tpu as pltpu

_LANES = 1024          # lane-dense last dim (multiple of 128)
_MAX_BLOCK_ROWS = 256  # 256 * 1024 * 4B = 1 MiB per f32 buffer


def _get_loss_kernel(bit_ref, mse_ref, loss_ref, *, lam):
    # Elementwise FMA on the VPU, accumulated in f32, cast on store.
    mse = mse_ref[...].astype(jnp.float32)
    bit = bit_ref[...].astype(jnp.float32)
    loss_ref[...] = (lam * mse + bit).astype(loss_ref.dtype)


def _round_up(x, m):
    return ((x + m - 1) // m) * m


def get_loss(bit, mse, lam=1.0):
    """Pallas equivalent of the PyTorch `get_loss` forward pass.

    Returns (lam * mse + bit, mse, bit).  `mse` and `bit` are passed through
    from the wrapper (no kernel copy).
    """
    assert bit.shape == mse.shape, "bit/mse shape mismatch"
    assert bit.dtype == mse.dtype, "bit/mse dtype mismatch"

    shape = bit.shape
    dtype = bit.dtype
    lam = float(lam)  # static scalar -> compiled into the kernel

    # Flatten to a lane-dense 2-D slab, padded to whole tiles.
    n = 1
    for d in shape:
        n *= d

    rows = pl.cdiv(n, _LANES)
    block_rows = min(_MAX_BLOCK_ROWS, _round_up(rows, 8))
    padded_rows = _round_up(rows, block_rows)
    padded_n = padded_rows * _LANES

    def _to_slab(x):
        flat = x.reshape((-1,))
        if padded_n != n:
            flat = jnp.pad(flat, (0, padded_n - n))
        return flat.reshape((padded_rows, _LANES))

    bit2d = _to_slab(bit)
    mse2d = _to_slab(mse)

    grid = (padded_rows // block_rows,)
    block_spec = pl.BlockSpec((block_rows, _LANES), lambda i: (i, 0))

    kernel = functools.partial(_get_loss_kernel, lam=lam)

    loss2d = pl.pallas_call(
        kernel,
        out_shape=jax.ShapeDtypeStruct((padded_rows, _LANES), dtype),
        grid=grid,
        in_specs=[block_spec, block_spec],
        out_specs=block_spec,
        compiler_params=pltpu.CompilerParams(
            dimension_semantics=("parallel",),
        ),
    )(bit2d, mse2d)

    loss = loss2d.reshape((-1,))[:n].reshape(shape)
    # Pass-throughs are returned directly (no HBM copy in the kernel).
    return loss, mse, bit


if __name__ == "__main__":
    key = jax.random.PRNGKey(0)
    k_bit, k_mse = jax.random.split(key)

    # Small, vreg-aligned shapes (8 sublanes x 128 lanes).
    bit = jax.random.uniform(k_bit, (8, 128), dtype=jnp.float32)
    mse = jax.random.uniform(k_mse, (8, 128), dtype=jnp.float32)
    lam = 1.0

    loss, mse_out, bit_out = get_loss(bit, mse, lam=lam)
    jax.block_until_ready((loss, mse_out, bit_out))

    # Reference check in plain JAX.
    ref_loss = lam * mse + bit
    assert loss.shape == bit.shape and loss.dtype == bit.dtype
    assert jnp.allclose(loss, ref_loss, atol=1e-6)
    assert jnp.allclose(mse_out, mse)
    assert jnp.allclose(bit_out, bit)

    print("KERNEL_OK")
</pallas_src>

<mosaic_0001>
module attributes {stable_mosaic.version = 11 : i64} {
  func.func @_get_loss_kernel(%arg0: i32, %arg1: memref<8x1024xf32, #tpu.memory_space<vmem>>, %arg2: memref<8x1024xf32, #tpu.memory_space<vmem>>, %arg3: memref<8x1024xf32, #tpu.memory_space<vmem>>) attributes {dimension_semantics = [#tpu.dimension_semantics<parallel>], iteration_bounds = array<i64: 1>, scalar_prefetch = 0 : i64, scratch_operands = 0 : i64, tpu.core_type = #tpu.core_type<tc>, window_params = [{transform_indices = @transform_0, window_bounds = array<i64: 8, 1024>}, {transform_indices = @transform_1, window_bounds = array<i64: 8, 1024>}, {transform_indices = @transform_2, window_bounds = array<i64: 8, 1024>}]} {
    %c0 = arith.constant 0 : index
    %c0_0 = arith.constant 0 : index
    %0 = vector.load %arg2[%c0, %c0_0] : memref<8x1024xf32, #tpu.memory_space<vmem>>, vector<8x1024xf32>
    %c0_1 = arith.constant 0 : index
    %c0_2 = arith.constant 0 : index
    %1 = vector.load %arg1[%c0_1, %c0_2] : memref<8x1024xf32, #tpu.memory_space<vmem>>, vector<8x1024xf32>
    %cst = arith.constant 1.000000e+00 : f32
    %2 = vector.broadcast %cst : f32 to vector<8x1024xf32>
    %3 = arith.mulf %2, %0 : vector<8x1024xf32>
    %4 = arith.addf %3, %1 : vector<8x1024xf32>
    %c0_3 = arith.constant 0 : index
    %c0_4 = arith.constant 0 : index
    %5 = vector.load %arg3[%c0_3, %c0_4] : memref<8x1024xf32, #tpu.memory_space<vmem>>, vector<8x1024xf32>
    tpu.vector_store %arg3[%c0_3, %c0_4], %4 {strides = array<i32>} : memref<8x1024xf32, #tpu.memory_space<vmem>>, vector<8x1024xf32>,
    return
  }
  func.func @transform_0(%arg0: i32) -> (i32, i32) {
    %c0_i32 = arith.constant 0 : i32
    %c0_i32_0 = arith.constant 0 : i32
    return %arg0, %c0_i32 : i32, i32
  }
  func.func @transform_1(%arg0: i32) -> (i32, i32) {
    %c0_i32 = arith.constant 0 : i32
    %c0_i32_0 = arith.constant 0 : i32
    return %arg0, %c0_i32 : i32, i32
  }
  func.func @transform_2(%arg0: i32) -> (i32, i32) {
    %c0_i32 = arith.constant 0 : i32
    %c0_i32_0 = arith.constant 0 : i32
    return %arg0, %c0_i32 : i32, i32
  }
}

</mosaic_0001>

<llo_original>
// kernel: tpu_custom_call.1
$region0: #{tpu_custom_call.1}
  #allocation0 [shape = 'u32[]', space=smem, size = 0x4, offset = 0x4, fixed_abs, tag = 'smem constant byte address 0x4 - core index']
  #allocation1 [shape = 'u32[144,128]{1,0:T(1,128)}', space=vmem, size = 0x12000, scoped, tag = 'internal scratch']
  %s0 = inlined_call_operand.hbm [shape: f32[8,1024], index: 0, kind: input, shape index: {}]
  %s1 = inlined_call_operand.hbm [shape: f32[8,1024], index: 1, kind: input, shape index: {}]
  %s2 = inlined_call_operand.hbm [shape: f32[8,1024], index: 2, kind: output, shape index: {}]
  %s3 = sld [smem:[#allocation0]]
  $region26: #{tpu_custom_call.1} parent=0
    _
  %s5 = ssub.s32 1, %s3
  %s6 = scalar_select 0, %s5, %s3
  $region1: #{tpu_custom_call.1} parent=0
    #allocation2 [shape = 'u8[32768]{0}', space=vmem, size = 0x8000, scoped, tag = 'input window, operand 0, single buffered']
    #allocation3 [shape = 's32[1]{0}', space=sflag, size = 0x4, scoped, tag = 'scoped memory for tpu_custom_call.1']
    #allocation4 [shape = 's32[1]{0}', space=sflag, size = 0x4, scoped, tag = 'scoped memory for tpu_custom_call.1']
    #allocation5 [shape = 'u8[32768]{0}', space=vmem, size = 0x8000, scoped, tag = 'input window, operand 1, single buffered']
    #allocation6 [shape = 's32[1]{0}', space=sflag, size = 0x4, scoped, tag = 'scoped memory for tpu_custom_call.1']
    #allocation7 [shape = 'u8[32768]{0}', space=vmem, size = 0x8000, scoped, tag = 'output window, operand 0, single buffered']
    %7 = vsyncpa [#allocation3], 0
    %8 = vsyncpa [#allocation6], 0
    %9 = vsyncpa [#allocation4], 0
    // Predicated region
    $region2: #{tpu_custom_call.1} parent=1 // pred_check
      _
    $region3: #{tpu_custom_call.1} parent=1 // pred_check_branch
      %11 = sbr.rel (0) target = $region5
    $region4: #{tpu_custom_call.1} parent=1 // pred_region
      %s13 = ssub.s32 1024, 1024
      %14 = vsyncadd [#allocation3], %s13
      %s16 = sshll.u32 [#allocation2], 4
      %s17 = int_to_ptr.vmem [resolvable:$true] %s16
      %19 = dma.hbm_to_vmem [thread:$0]  %s0, 1024, %s17, [#allocation3]
    $region5: #{tpu_custom_call.1} parent=1 // pred_fallthru
      _
    // Predicated region
    $region6: #{tpu_custom_call.1} parent=1 // pred_check
      _
    $region7: #{tpu_custom_call.1} parent=1 // pred_check_branch
      %21 = sbr.rel (0) target = $region9
    $region8: #{tpu_custom_call.1} parent=1 // pred_region
      %s23 = ssub.s32 1024, 1024
      %24 = vsyncadd [#allocation6], %s23
      %s26 = sshll.u32 [#allocation5], 4
      %s27 = int_to_ptr.vmem [resolvable:$true] %s26
      %29 = dma.hbm_to_vmem [thread:$0]  %s1, 1024, %s27, [#allocation6]
    $region9: #{tpu_custom_call.1} parent=1 // pred_fallthru
      _
    // Predicated region
    $region10: #{tpu_custom_call.1} parent=1 // pred_check
      _
    $region11: #{tpu_custom_call.1} parent=1 // pred_check_branch
      %31 = sbr.rel (0) target = $region13
    $region12: #{tpu_custom_call.1} parent=1 // pred_region
      %32 = dma.done [#allocation3], 1024
    $region13: #{tpu_custom_call.1} parent=1 // pred_fallthru
      _
    // Predicated region
    $region14: #{tpu_custom_call.1} parent=1 // pred_check
      _
    $region15: #{tpu_custom_call.1} parent=1 // pred_check_branch
      %34 = sbr.rel (0) target = $region17
    $region16: #{tpu_custom_call.1} parent=1 // pred_region
      %35 = dma.done [#allocation6], 1024
    $region17: #{tpu_custom_call.1} parent=1 // pred_fallthru
      _
    %v36 = vld [vmem:[#allocation5] sm:$0xff]
    %v37 = vld [vmem:[#allocation5 + $0x8] sm:$0xff]
    %v38 = vld [vmem:[#allocation5 + $0x10] sm:$0xff]
    %v39 = vld [vmem:[#allocation5 + $0x18] sm:$0xff]
    %v40 = vld [vmem:[#allocation5 + $0x20] sm:$0xff]
    %v41 = vld [vmem:[#allocation5 + $0x28] sm:$0xff]
    %v42 = vld [vmem:[#allocation5 + $0x30] sm:$0xff]
    %v43 = vld [vmem:[#allocation5 + $0x38] sm:$0xff]
    %v44 = vld [vmem:[#allocation2] sm:$0xff]
    %v45 = vld [vmem:[#allocation2 + $0x8] sm:$0xff]
    %v46 = vld [vmem:[#allocation2 + $0x10] sm:$0xff]
    %v47 = vld [vmem:[#allocation2 + $0x18] sm:$0xff]
    %v48 = vld [vmem:[#allocation2 + $0x20] sm:$0xff]
    %v49 = vld [vmem:[#allocation2 + $0x28] sm:$0xff]
    %v50 = vld [vmem:[#allocation2 + $0x30] sm:$0xff]
    %v51 = vld [vmem:[#allocation2 + $0x38] sm:$0xff]
    %v52 = vadd.f32 %v36, %v44
    %v53 = vadd.f32 %v37, %v45
    %v54 = vadd.f32 %v38, %v46
    %v55 = vadd.f32 %v39, %v47
    %v56 = vadd.f32 %v40, %v48
    %v57 = vadd.f32 %v41, %v49
    %v58 = vadd.f32 %v42, %v50
    %v59 = vadd.f32 %v43, %v51
    %60 = vst [vmem:[#allocation7] sm:$0xff] %v52
    %61 = vst [vmem:[#allocation7 + $0x8] sm:$0xff] %v53
    %62 = vst [vmem:[#allocation7 + $0x10] sm:$0xff] %v54
    %63 = vst [vmem:[#allocation7 + $0x18] sm:$0xff] %v55
    %64 = vst [vmem:[#allocation7 + $0x20] sm:$0xff] %v56
    %65 = vst [vmem:[#allocation7 + $0x28] sm:$0xff] %v57
    %66 = vst [vmem:[#allocation7 + $0x30] sm:$0xff] %v58
    %67 = vst [vmem:[#allocation7 + $0x38] sm:$0xff] %v59
    // Predicated region
    $region18: #{tpu_custom_call.1} parent=1 // pred_check
      _
    $region19: #{tpu_custom_call.1} parent=1 // pred_check_branch
      %69 = sbr.rel (0) target = $region21
    $region20: #{tpu_custom_call.1} parent=1 // pred_region
      %s71 = ssub.s32 1024, 1024
      %72 = vsyncadd [#allocation4], %s71
      %s74 = sshll.u32 [#allocation7], 4
      %s75 = int_to_ptr.vmem [resolvable:$true] %s74
      %77 = dma.vmem_to_hbm [thread:$0]  %s75, 1024, %s2, [#allocation4]
    $region21: #{tpu_custom_call.1} parent=1 // pred_fallthru
      _
    // Predicated region
    $region22: #{tpu_custom_call.1} parent=1 // pred_check
      _
    $region23: #{tpu_custom_call.1} parent=1 // pred_check_branch
      %79 = sbr.rel (0) target = $region25
    $region24: #{tpu_custom_call.1} parent=1 // pred_region
      %80 = dma.done [#allocation4], 1024
    $region25: #{tpu_custom_call.1} parent=1 // pred_fallthru
      _
    %81 = vsyncpa [#allocation3], 1
    %82 = vsyncpa [#allocation6], 1
    %83 = vsyncpa [#allocation4], 1

</llo_original>
